<compile_context>
chip_gen: v5e
topology: v5e:2x2
jax: 0.10.0
libtpu: 0.0.40
codegen_flags: <defaults>
</compile_context>

<pallas_src>
import functools

import jax
import jax.numpy as jnp
from jax import lax
from jax.experimental import pallas as pl
from jax.experimental.pallas import tpu as pltpu


N_LAYERS = 4
VMEM_LIMIT = 32 * 1024 * 1024  # safe on v5e/v6e/v7x; blocks here are tiny


def _pick_row_tile(n, max_tile=1024):
    if n <= max_tile:
        return n
    for t in (1024, 512, 256, 128, 64, 32, 16, 8):
        if t <= max_tile and n % t == 0:
            return t
    return n


# ----------------------------- lifting layer (fc0) ---------------------------

def _linear_kernel(x_ref, w_ref, b_ref, o_ref, *, relu, compute_dtype):
    y = jnp.dot(x_ref[...].astype(compute_dtype), w_ref[...].astype(compute_dtype),
                preferred_element_type=jnp.float32) + b_ref[...]
    if relu:
        y = jnp.maximum(y, 0.0)
    o_ref[...] = y.astype(o_ref.dtype)


def linear(x, w, b, *, relu=False, compute_dtype=jnp.bfloat16):
    n, din = x.shape
    dout = w.shape[1]
    tn = _pick_row_tile(n)
    return pl.pallas_call(
        functools.partial(_linear_kernel, relu=relu, compute_dtype=compute_dtype),
        out_shape=jax.ShapeDtypeStruct((n, dout), jnp.float32),
        grid=(n // tn,),
        in_specs=[
            pl.BlockSpec((tn, din), lambda i: (i, 0)),
            pl.BlockSpec((din, dout), lambda i: (0, 0)),
            pl.BlockSpec((1, dout), lambda i: (0, 0)),
        ],
        out_specs=pl.BlockSpec((tn, dout), lambda i: (i, 0)),
        compiler_params=pltpu.CompilerParams(
            dimension_semantics=("parallel",),
            vmem_limit_bytes=VMEM_LIMIT),
    )(x, w, b)


# ----------------------- fused projection head (fc1+relu+fc2) ----------------

def _proj_head_kernel(x_ref, w1_ref, b1_ref, w2_ref, b2_ref, o_ref, *, compute_dtype):
    h = jnp.dot(x_ref[...].astype(compute_dtype), w1_ref[...].astype(compute_dtype),
                preferred_element_type=jnp.float32) + b1_ref[...]
    h = jnp.maximum(h, 0.0)
    y = jnp.dot(h.astype(compute_dtype), w2_ref[...].astype(compute_dtype),
                preferred_element_type=jnp.float32) + b2_ref[...]
    o_ref[...] = y.astype(o_ref.dtype)


def proj_head(x, w1, b1, w2, b2, *, compute_dtype=jnp.bfloat16):
    n, din = x.shape
    dh = w1.shape[1]
    dout = w2.shape[1]
    tn = _pick_row_tile(n)
    return pl.pallas_call(
        functools.partial(_proj_head_kernel, compute_dtype=compute_dtype),
        out_shape=jax.ShapeDtypeStruct((n, dout), jnp.float32),
        grid=(n // tn,),
        in_specs=[
            pl.BlockSpec((tn, din), lambda i: (i, 0)),
            pl.BlockSpec((din, dh), lambda i: (0, 0)),
            pl.BlockSpec((1, dh), lambda i: (0, 0)),
            pl.BlockSpec((dh, dout), lambda i: (0, 0)),
            pl.BlockSpec((1, dout), lambda i: (0, 0)),
        ],
        out_specs=pl.BlockSpec((tn, dout), lambda i: (i, 0)),
        compiler_params=pltpu.CompilerParams(
            dimension_semantics=("parallel",),
            vmem_limit_bytes=VMEM_LIMIT),
    )(x, w1, b1, w2, b2)


# --------------------- fused 4-layer Fourier trunk (conv + w) ----------------

def _fourier_blocks_kernel(x_ref, dftf_ref, dfti_ref, ws_ref, wc_ref, wb_ref,
                           o_ref, h_ref, *, compute_dtype):
    """One (batch-element, layer) grid step of the fused FNO trunk.

    Per-step views (C = width, M = retained Fourier modes):
      x_ref   : (S, C)      lifted input (channels-last), read only at layer 0
      dftf_ref: (2M, S)     truncated rfft, rows interleaved [Re_0; Im_0; Re_1; ...]
      dfti_ref: (S, 2M)     truncated irfft, cols interleaved [Re_0, Im_0, ...]
      ws_ref  : (M, C, 2C)  spectral weights per mode, [Wr_m | Wi_m] (lane-dense)
      wc_ref  : (C, C)      1x1-conv weight stored (in, out)
      wb_ref  : (1, C)      1x1-conv bias
      o_ref   : (S, C)      written only at the last layer
      h_ref   : (S, C) f32  VMEM-resident activation carried across the 4 layers
    """
    l = pl.program_id(1)
    n_layers = pl.num_programs(1)
    s, c = h_ref.shape
    m = ws_ref.shape[0]

    @pl.when(l == 0)
    def _():
        h_ref[...] = x_ref[...]

    h = h_ref[...]
    hc = h.astype(compute_dtype)

    # ---- spectral path -------------------------------------------------------
    # truncated rfft of all channels: ONE MXU matmul (2M, S) @ (S, C)
    xft = jnp.dot(dftf_ref[...].astype(compute_dtype), hc,
                  preferred_element_type=jnp.float32)              # (2M, C)
    xs = xft.reshape(m, 2, c).astype(compute_dtype)                # [m,0]=Re_m, [m,1]=Im_m

    # complex channel mix as ONE mode-batched real matmul on the MXU:
    #   ym[m] = [[Re_m], [Im_m]] @ [Wr_m | Wi_m]     -> (2, 2C)
    ym = lax.dot_general(
        xs, ws_ref[...].astype(compute_dtype),
        dimension_numbers=(((2,), (1,)), ((0,), (0,))),
        preferred_element_type=jnp.float32)                        # (M, 2, 2C)

    # real/imag recombination (cheap VPU adds)
    out_re = ym[:, 0:1, :c] - ym[:, 1:2, c:]                       # (M, 1, C)
    out_im = ym[:, 0:1, c:] + ym[:, 1:2, :c]                       # (M, 1, C)
    yf = jnp.concatenate([out_re, out_im], axis=1).reshape(2 * m, c)

    # truncated irfft: ONE MXU matmul (S, 2M) @ (2M, C)
    yspec = jnp.dot(dfti_ref[...].astype(compute_dtype), yf.astype(compute_dtype),
                    preferred_element_type=jnp.float32)            # (S, C)

    # ---- pointwise Conv1d path (channels-last => row-major lane-dense matmul)
    yw = jnp.dot(hc, wc_ref[...].astype(compute_dtype),
                 preferred_element_type=jnp.float32) + wb_ref[...]

    y = yspec + yw

    @pl.when(l < n_layers - 1)
    def _():
        h_ref[...] = jnp.maximum(y, 0.0)     # relu between blocks only

    @pl.when(l == n_layers - 1)
    def _():
        o_ref[...] = y.astype(o_ref.dtype)   # no relu after the last block


def fourier_blocks(h, dftf, dfti, wspec, wconv, bconv, *, compute_dtype=jnp.bfloat16):
    b, s, c = h.shape
    n_layers, m = wspec.shape[0], wspec.shape[1]
    m2 = 2 * m
    return pl.pallas_call(
        functools.partial(_fourier_blocks_kernel, compute_dtype=compute_dtype),
        out_shape=jax.ShapeDtypeStruct((b, s, c), jnp.float32),
        grid=(b, n_layers),
        in_specs=[
            pl.BlockSpec((None, s, c), lambda bi, li: (bi, 0, 0)),
            pl.BlockSpec((m2, s), lambda bi, li: (0, 0)),
            pl.BlockSpec((s, m2), lambda bi, li: (0, 0)),
            pl.BlockSpec((None, m, c, 2 * c), lambda bi, li: (li, 0, 0, 0)),
            pl.BlockSpec((None, c, c), lambda bi, li: (li, 0, 0)),
            pl.BlockSpec((None, 1, c), lambda bi, li: (li, 0, 0)),
        ],
        out_specs=pl.BlockSpec((None, s, c), lambda bi, li: (bi, 0, 0)),
        scratch_shapes=[pltpu.VMEM((s, c), jnp.float32)],
        compiler_params=pltpu.CompilerParams(
            dimension_semantics=("parallel", "arbitrary"),
            vmem_limit_bytes=VMEM_LIMIT),
    )(h, dftf, dfti, wspec, wconv, bconv)


# ------------------------------ host-side glue -------------------------------

def make_dft_matrices(s, modes):
    """Truncated rfft / irfft as real matrices (matching torch.fft semantics)."""
    assert modes <= s // 2 + 1, "modes1 must not exceed S // 2 + 1"
    n = jnp.arange(s, dtype=jnp.float32)
    k = jnp.arange(modes, dtype=jnp.float32)
    ang = 2.0 * jnp.pi * n[:, None] * k[None, :] / s            # (S, M)
    dr = jnp.cos(ang)                                           # Re(rfft)
    di = -jnp.sin(ang)                                          # Im(rfft)

    kk = jnp.arange(modes)
    is_dc = kk == 0
    is_nyq = (kk == s // 2) if s % 2 == 0 else jnp.zeros_like(kk, dtype=bool)
    coef = jnp.where(is_dc | is_nyq, 1.0 / s, 2.0 / s).astype(jnp.float32)
    ang2 = 2.0 * jnp.pi * k[:, None] * n[None, :] / s           # (M, S)
    er = coef[:, None] * jnp.cos(ang2)
    # c2r (irfft) convention: imaginary parts of DC / Nyquist bins are ignored
    imag_coef = jnp.where(is_dc | is_nyq, 0.0, coef).astype(jnp.float32)
    ei = -imag_coef[:, None] * jnp.sin(ang2)
    return dr, di, er, ei


def pack_dft_for_kernel(dr, di, er, ei):
    s, m = dr.shape
    # forward: (2M, S), rows interleaved [Re_0; Im_0; Re_1; Im_1; ...]
    dftf = jnp.stack([dr.T, di.T], axis=1).reshape(2 * m, s)
    # inverse: (S, 2M), cols interleaved [Re_0, Im_0, Re_1, Im_1, ...]
    dfti = jnp.stack([er, ei], axis=1).reshape(2 * m, s).T
    return dftf, dfti


def init_params(key, width, modes):
    ks = jax.random.split(key, 10)
    p = {
        "fc0_w": jax.random.normal(ks[0], (2, width), jnp.float32) * 0.5,
        "fc0_b": jax.random.normal(ks[1], (1, width), jnp.float32) * 0.1,
        "fc1_w": jax.random.normal(ks[2], (width, 128), jnp.float32) / jnp.sqrt(float(width)),
        "fc1_b": jax.random.normal(ks[3], (1, 128), jnp.float32) * 0.1,
        "fc2_w": jax.random.normal(ks[4], (128, 1), jnp.float32) / jnp.sqrt(128.0),
        "fc2_b": jax.random.normal(ks[5], (1, 1), jnp.float32) * 0.1,
    }
    scale_spec = 1.0 / (width * width)
    for l in range(N_LAYERS):
        k1, k2, k3, k4 = jax.random.split(ks[6 + l], 4)
        # torch layout: weights1 (in_channels, out_channels, modes), complex
        p[f"spec{l}_wr"] = scale_spec * jax.random.uniform(k1, (width, width, modes), jnp.float32)
        p[f"spec{l}_wi"] = scale_spec * jax.random.uniform(k2, (width, width, modes), jnp.float32)
        # torch Conv1d(width, width, 1): weight (out, in), bias (out,)
        p[f"w{l}_w"] = jax.random.normal(k3, (width, width), jnp.float32) / float(width)
        p[f"w{l}_b"] = jax.random.normal(k4, (width,), jnp.float32) * 0.1
    return p


def pack_kernel_params(params):
    """Repack torch-layout params into kernel-friendly (mode-major, lane-dense) layouts."""
    width = params["fc0_w"].shape[1]
    wspec, wconv, bconv = [], [], []
    for l in range(N_LAYERS):
        wr = jnp.transpose(params[f"spec{l}_wr"], (2, 0, 1))   # (M, C_in, C_out)
        wi = jnp.transpose(params[f"spec{l}_wi"], (2, 0, 1))
        wspec.append(jnp.concatenate([wr, wi], axis=2))        # (M, C_in, 2*C_out)
        wconv.append(params[f"w{l}_w"].T)                      # (C_in, C_out)
        bconv.append(params[f"w{l}_b"].reshape(1, width))
    kp = {k: params[k] for k in ("fc0_w", "fc0_b", "fc1_w", "fc1_b", "fc2_w", "fc2_b")}
    kp["wspec"] = jnp.stack(wspec)     # (L, M, C, 2C)
    kp["wconv"] = jnp.stack(wconv)     # (L, C, C)
    kp["bconv"] = jnp.stack(bconv)     # (L, 1, C)
    return kp


def fno1d_forward(kparams, dftf, dfti, x, *, compute_dtype=jnp.bfloat16):
    b, s, cin = x.shape
    width = kparams["fc0_w"].shape[1]
    # fc0: lift (a(x), x) -> width channels (channels-last, so no permutes needed)
    h = linear(x.reshape(b * s, cin), kparams["fc0_w"], kparams["fc0_b"],
               relu=False, compute_dtype=compute_dtype)
    h = h.reshape(b, s, width)
    # fused 4 x (SpectralConv1d + Conv1d_1x1 [+ relu])
    h = fourier_blocks(h, dftf, dfti, kparams["wspec"], kparams["wconv"],
                       kparams["bconv"], compute_dtype=compute_dtype)
    # fused fc1 + relu + fc2
    y = proj_head(h.reshape(b * s, width), kparams["fc1_w"], kparams["fc1_b"],
                  kparams["fc2_w"], kparams["fc2_b"], compute_dtype=compute_dtype)
    return y.reshape(b, s, 1)


def fno1d_reference(params, dft, x):
    """Pure-jnp f32 reference with PyTorch-equivalent math, for validation."""
    dr, di, er, ei = dft
    b, s, _ = x.shape
    width = params["fc0_w"].shape[1]
    with jax.default_matmul_precision("highest"):
        h = x.reshape(b * s, 2) @ params["fc0_w"] + params["fc0_b"]
        h = h.reshape(b, s, width).transpose(0, 2, 1)          # (B, C, S), like torch
        for l in range(N_LAYERS):
            xr = jnp.einsum("bcs,sm->bcm", h, dr)
            xi = jnp.einsum("bcs,sm->bcm", h, di)
            wr, wi = params[f"spec{l}_wr"], params[f"spec{l}_wi"]
            outr = jnp.einsum("bim,iom->bom", xr, wr) - jnp.einsum("bim,iom->bom", xi, wi)
            outi = jnp.einsum("bim,iom->bom", xr, wi) + jnp.einsum("bim,iom->bom", xi, wr)
            yspec = jnp.einsum("bom,ms->bos", outr, er) + jnp.einsum("bom,ms->bos", outi, ei)
            yw = jnp.einsum("oi,bis->bos", params[f"w{l}_w"], h) + params[f"w{l}_b"][None, :, None]
            h = yspec + yw
            if l < N_LAYERS - 1:
                h = jnp.maximum(h, 0.0)
        h = h.transpose(0, 2, 1).reshape(b * s, width)
        h = jnp.maximum(h @ params["fc1_w"] + params["fc1_b"], 0.0)
        y = h @ params["fc2_w"] + params["fc2_b"]
    return y.reshape(b, s, 1)


if __name__ == "__main__":
    BATCH, S, MODES, WIDTH = 2, 16, 8, 16   # input (B, x=S, c=2) -> output (B, S, 1)

    key = jax.random.PRNGKey(0)
    kx, kp = jax.random.split(key)
    x = jax.random.normal(kx, (BATCH, S, 2), jnp.float32)

    params = init_params(kp, WIDTH, MODES)
    dr, di, er, ei = make_dft_matrices(S, MODES)
    dftf, dfti = pack_dft_for_kernel(dr, di, er, ei)
    kparams = pack_kernel_params(params)

    # bf16-operand / f32-accumulation path (the optimized configuration)
    y_bf16 = fno1d_forward(kparams, dftf, dfti, x, compute_dtype=jnp.bfloat16)
    jax.block_until_ready(y_bf16)
    # f32 path, used for a tight structural-correctness check
    y_f32 = fno1d_forward(kparams, dftf, dfti, x, compute_dtype=jnp.float32)
    jax.block_until_ready(y_f32)

    y_ref = fno1d_reference(params, (dr, di, er, ei), x)

    assert y_bf16.shape == (BATCH, S, 1)
    assert bool(jnp.all(jnp.isfinite(y_bf16)))
    err_f32 = float(jnp.max(jnp.abs(y_f32 - y_ref)))
    err_bf16 = float(jnp.max(jnp.abs(y_bf16 - y_ref)))
    assert bool(jnp.allclose(y_f32, y_ref, rtol=1e-2, atol=1e-2)), (
        "f32 kernel mismatch, max abs diff = %g" % err_f32)
    assert bool(jnp.allclose(y_bf16, y_ref, rtol=5e-2, atol=5e-2)), (
        "bf16 kernel mismatch, max abs diff = %g" % err_bf16)

    print("KERNEL_OK")
</pallas_src>

<mosaic_0001>
module attributes {stable_mosaic.version = 11 : i64} {
  func.func @_linear_kernel(%arg0: i32, %arg1: memref<32x2xf32, #tpu.memory_space<vmem>>, %arg2: memref<2x16xf32, #tpu.memory_space<vmem>>, %arg3: memref<1x16xf32, #tpu.memory_space<vmem>>, %arg4: memref<32x16xf32, #tpu.memory_space<vmem>>) attributes {dimension_semantics = [#tpu.dimension_semantics<parallel>], iteration_bounds = array<i64: 1>, scalar_prefetch = 0 : i64, scratch_operands = 0 : i64, tpu.core_type = #tpu.core_type<tc>, window_params = [{transform_indices = @transform_0, window_bounds = array<i64: 32, 2>}, {pipeline_mode = #tpu.pipeline_mode<synchronous>, transform_indices = @transform_1, window_bounds = array<i64: 2, 16>}, {pipeline_mode = #tpu.pipeline_mode<synchronous>, transform_indices = @transform_2, window_bounds = array<i64: 1, 16>}, {transform_indices = @transform_3, window_bounds = array<i64: 32, 16>}]} {
    %c0 = arith.constant 0 : index
    %c0_0 = arith.constant 0 : index
    %0 = vector.load %arg1[%c0, %c0_0] : memref<32x2xf32, #tpu.memory_space<vmem>>, vector<32x2xf32>
    %1 = arith.truncf %0 : vector<32x2xf32> to vector<32x2xbf16>
    %c0_1 = arith.constant 0 : index
    %c0_2 = arith.constant 0 : index
    %2 = vector.load %arg2[%c0_1, %c0_2] : memref<2x16xf32, #tpu.memory_space<vmem>>, vector<2x16xf32>
    %3 = arith.truncf %2 : vector<2x16xf32> to vector<2x16xbf16>
    %cst = arith.constant dense<0.000000e+00> : vector<32x16xf32>
    %4 = tpu.matmul %1, %3, %cst {dimension_numbers = #tpu.dot_dimension_numbers<[1], [0], [0], [1], [0, 0, 1, 1], [], []>} : vector<32x2xbf16>, vector<2x16xbf16>, vector<32x16xf32> -> vector<32x16xf32>
    %c0_3 = arith.constant 0 : index
    %c0_4 = arith.constant 0 : index
    %5 = vector.load %arg3[%c0_3, %c0_4] : memref<1x16xf32, #tpu.memory_space<vmem>>, vector<1x16xf32>
    %6 = vector.broadcast %5 : vector<1x16xf32> to vector<32x16xf32>
    %7 = arith.addf %4, %6 : vector<32x16xf32>
    %c0_5 = arith.constant 0 : index
    %c0_6 = arith.constant 0 : index
    %8 = vector.load %arg4[%c0_5, %c0_6] : memref<32x16xf32, #tpu.memory_space<vmem>>, vector<32x16xf32>
    tpu.vector_store %arg4[%c0_5, %c0_6], %7 {strides = array<i32>} : memref<32x16xf32, #tpu.memory_space<vmem>>, vector<32x16xf32>,
    return
  }
  func.func @transform_0(%arg0: i32) -> (i32, i32) {
    %c0_i32 = arith.constant 0 : i32
    %c0_i32_0 = arith.constant 0 : i32
    return %arg0, %c0_i32 : i32, i32
  }
  func.func @transform_1(%arg0: i32) -> (i32, i32) {
    %c0_i32 = arith.constant 0 : i32
    %c0_i32_0 = arith.constant 0 : i32
    %c0_i32_1 = arith.constant 0 : i32
    return %c0_i32, %c0_i32_0 : i32, i32
  }
  func.func @transform_2(%arg0: i32) -> (i32, i32) {
    %c0_i32 = arith.constant 0 : i32
    %c0_i32_0 = arith.constant 0 : i32
    %c0_i32_1 = arith.constant 0 : i32
    return %c0_i32, %c0_i32_0 : i32, i32
  }
  func.func @transform_3(%arg0: i32) -> (i32, i32) {
    %c0_i32 = arith.constant 0 : i32
    %c0_i32_0 = arith.constant 0 : i32
    return %arg0, %c0_i32 : i32, i32
  }
}

</mosaic_0001>

<llo_original>
// kernel: tpu_custom_call.1
$region0: #{tpu_custom_call.1}
  #allocation0 [shape = 'u32[]', space=smem, size = 0x4, offset = 0x4, fixed_abs, tag = 'smem constant byte address 0x4 - core index']
  #allocation1 [shape = 'u32[72,128]{1,0:T(1,128)}', space=vmem, size = 0x9000, scoped, tag = 'internal scratch']
  %s0 = inlined_call_operand.vmem [shape: f32[32,2], index: 0, kind: input, shape index: {}]
  %s1 = inlined_call_operand.vmem [shape: f32[2,16], index: 1, kind: input, shape index: {}]
  %s2 = inlined_call_operand.vmem [shape: f32[1,16], index: 2, kind: input, shape index: {}]
  %s3 = inlined_call_operand.vmem [shape: f32[32,16], index: 3, kind: output, shape index: {}]
  %s4 = sld [smem:[#allocation0]]
  $region22: #{tpu_custom_call.1} parent=0
    _
  %s6 = ssub.s32 1, %s4
  %s7 = scalar_select 0, %s6, %s4
  // Predicated region
  $region2: #{tpu_custom_call.1} parent=0 // pred_check
    _
  $region3: #{tpu_custom_call.1} parent=0 // pred_check_branch
    %9 = sbr.rel (0) target = $region5
  $region4: #{tpu_custom_call.1} parent=0 // pred_region
    _
  $region5: #{tpu_custom_call.1} parent=0 // pred_fallthru
    _
  // Predicated region
  $region6: #{tpu_custom_call.1} parent=0 // pred_check
    _
  $region7: #{tpu_custom_call.1} parent=0 // pred_check_branch
    %11 = sbr.rel (0) target = $region9
  $region8: #{tpu_custom_call.1} parent=0 // pred_region
    _
  $region9: #{tpu_custom_call.1} parent=0 // pred_fallthru
    _
  // Predicated region
  $region10: #{tpu_custom_call.1} parent=0 // pred_check
    _
  $region11: #{tpu_custom_call.1} parent=0 // pred_check_branch
    %13 = sbr.rel (0) target = $region13
  $region12: #{tpu_custom_call.1} parent=0 // pred_region
    _
  $region13: #{tpu_custom_call.1} parent=0 // pred_fallthru
    _
  %v15 = vld [vmem:[%s0] sm:$0xff]
  %v16 = vld [vmem:[%s0 + $0x8] sm:$0xff]
  %v17 = vld [vmem:[%s0 + $0x10] sm:$0xff]
  %v18 = vld [vmem:[%s0 + $0x18] sm:$0xff]
  %v19 = vpack.c.bf16 %v16, %v15
  %v20 = vpack.c.bf16 %v18, %v17
  %v21 = vld [vmem:[%s1] sm:$0x3]
  %v22 = vpack.c.bf16 %v21, %v21
  %v23 = vld [vmem:[%s2] sm:$0x1]
  %v25 = vperm.slane %v23, 0
  %vm27 = vcmask 15360
  %v29 = vsel %vm27, %v19, 0
  %v32 = vsel %vm27, %v20, 0
  %vm34 = vcmask 1040384
  %v36 = vsel %vm34, %v22, 0
  %38 = vmatpush.bf16.msra.mxu0 0
  %39 = vmatpush.bf16.msra.mxu0 0
  %40 = vmatpush.bf16.msra.mxu0 0
  %41 = vmatpush.bf16.msra.mxu0 0
  %42 = vmatpush.bf16.msra.mxu0 0
  %43 = vmatpush.bf16.msra.mxu0 0
  %44 = vmatpush.bf16.msra.mxu0 0
  %45 = vmatpush.bf16.msra.mxu0 %v36
  %46 = vmatmul.bf16.gmra.mxu0 %v29
  %v47 = vpop.f32.mrf.mxu0
  %v48 = vadd.f32 %v25, %v47
  %v49 = vpop.f32.mrf.mxu0
  %v50 = vadd.f32 %v25, %v49
  %51 = vmatmul.bf16.gmra.mxu0 %v32
  %v52 = vpop.f32.mrf.mxu0
  %v53 = vadd.f32 %v25, %v52
  %v54 = vpop.f32.mrf.mxu0
  %v55 = vadd.f32 %v25, %v54
  %56 = vdwg.mxu0
  %vm57 = vcmask 130048
  %58 = vst.msk [vmem:[%s3] sm:$0xff] %vm57, %v48
  %59 = vst.msk [vmem:[%s3 + $0x8] sm:$0xff] %vm57, %v50
  %60 = vst.msk [vmem:[%s3 + $0x10] sm:$0xff] %vm57, %v53
  %61 = vst.msk [vmem:[%s3 + $0x18] sm:$0xff] %vm57, %v55
  // Predicated region
  $region14: #{tpu_custom_call.1} parent=0 // pred_check
    _
  $region15: #{tpu_custom_call.1} parent=0 // pred_check_branch
    %63 = sbr.rel (0) target = $region17
  $region16: #{tpu_custom_call.1} parent=0 // pred_region
    _
  $region17: #{tpu_custom_call.1} parent=0 // pred_fallthru
    _
  // Predicated region
  $region18: #{tpu_custom_call.1} parent=0 // pred_check
    _
  $region19: #{tpu_custom_call.1} parent=0 // pred_check_branch
    %65 = sbr.rel (0) target = $region21
  $region20: #{tpu_custom_call.1} parent=0 // pred_region
    _
  $region21: #{tpu_custom_call.1} parent=0 // pred_fallthru
    _

</llo_original>
